<compile_context>
chip_gen: v5e
topology: v5e:2x2
jax: 0.10.0
libtpu: 0.0.40
codegen_flags: <defaults>
</compile_context>

<pallas_src>
import functools

import jax
import jax.numpy as jnp
from jax.experimental import pallas as pl
from jax.experimental.pallas import tpu as pltpu


def _round_up(a, b):
    return ((a + b - 1) // b) * b


def _patch_embed_kernel(x_ref, w_ref, b_ref, o_ref):
    # x_ref: (C, tn)  channel-major token tile (NCHW transpose fused via BlockSpec)
    # w_ref: (C, E)   full projection weight (grid-invariant)
    # b_ref: (1, E)   bias row
    # o_ref: (tn, E)  output token tile
    acc = jax.lax.dot_general(
        x_ref[...], w_ref[...],
        dimension_numbers=(((0,), (0,)), ((), ())),   # contract over C; MXU eats the
        preferred_element_type=jnp.float32)           # transposed LHS for free -> (tn, E)
    o_ref[...] = (acc + b_ref[...]).astype(o_ref.dtype)


@functools.partial(jax.jit, static_argnames=("tn",))
def patch_embedding(x, weight, bias, *, tn=512):
    """Pallas implementation of PatchEmbedding.forward.

    Args:
      x:      (B, C, H, W) float32
      weight: (E, C)  -- same convention as torch nn.Linear.weight
      bias:   (E,)
    Returns:
      (B, H*W, E) float32
    """
    B, C, H, W = x.shape
    E = weight.shape[0]
    N = H * W

    # Free reshape only -- no wrapper-side transpose or pad of the activations.
    x_cn = x.reshape(B, C, N)

    # Tiny one-time weight/bias prep (E x C elements, negligible vs. activations).
    w = jnp.transpose(weight).astype(jnp.float32)    # (C, E)
    b = bias.reshape(1, E).astype(jnp.float32)       # (1, E)

    # Token tile: big (amortizes ~0.35us/step pipeline overhead), multiple of 128,
    # but never larger than the (lane-rounded) token count.
    tn_eff = max(128, min(_round_up(tn, 128), _round_up(N, 128)))
    grid = (B, pl.cdiv(N, tn_eff))

    # TODO(synk): E=32 < 128 keeps output stores masked (non lane-dense); a
    # lane-dense (tn*E/128, 128) re-view of the accumulator would help further
    # but needs an in-kernel minor-dim relayout, so it is left out here.
    out = pl.pallas_call(
        _patch_embed_kernel,
        out_shape=jax.ShapeDtypeStruct((B, N, E), jnp.float32),
        grid_spec=pltpu.PrefetchScalarGridSpec(
            num_scalar_prefetch=0,
            grid=grid,
            in_specs=[
                # (1, C, tn) tile of (B, C, N); leading batch dim squeezed.
                pl.BlockSpec((None, C, tn_eff), lambda bi, ti: (bi, 0, ti)),
                pl.BlockSpec((C, E), lambda bi, ti: (0, 0)),   # full weight
                pl.BlockSpec((1, E), lambda bi, ti: (0, 0)),   # bias row
            ],
            out_specs=pl.BlockSpec((None, tn_eff, E), lambda bi, ti: (bi, ti, 0)),
        ),
        compiler_params=pltpu.CompilerParams(
            dimension_semantics=("parallel", "parallel"),
            vmem_limit_bytes=32 * 1024 * 1024,
        ),
    )(x_cn, w, b)
    return out


if __name__ == "__main__":
    # Small shapes consistent with the module: B=2, C=4, H=W=16, emb_size=32.
    B, C, H, W = 2, 4, 16, 16
    EMB = 32

    key = jax.random.PRNGKey(0)
    kx, kw, kb = jax.random.split(key, 3)

    x = jax.random.normal(kx, (B, C, H, W), dtype=jnp.float32)
    # Deterministic nn.Linear-style init: uniform(-1/sqrt(C), 1/sqrt(C)).
    bound = 1.0 / (C ** 0.5)
    weight = jax.random.uniform(kw, (EMB, C), minval=-bound, maxval=bound,
                                dtype=jnp.float32)
    bias = jax.random.uniform(kb, (EMB,), minval=-bound, maxval=bound,
                              dtype=jnp.float32)

    out = patch_embedding(x, weight, bias)
    out = jax.block_until_ready(out)

    # Pure-JAX reference check of the same semantics.
    x_ref = jnp.transpose(x.reshape(B, C, H * W), (0, 2, 1))
    ref = x_ref @ weight.T + bias
    assert out.shape == (B, H * W, EMB)
    assert jnp.allclose(out, ref, atol=1e-5, rtol=1e-5)

    print("KERNEL_OK")
</pallas_src>

<mosaic_0001>
module attributes {stable_mosaic.version = 11 : i64} {
  func.func @_patch_embed_kernel(%arg0: i32, %arg1: i32, %arg2: memref<1x4x256xf32, #tpu.memory_space<vmem>>, %arg3: memref<4x32xf32, #tpu.memory_space<vmem>>, %arg4: memref<1x32xf32, #tpu.memory_space<vmem>>, %arg5: memref<1x256x32xf32, #tpu.memory_space<vmem>>) attributes {dimension_semantics = [#tpu.dimension_semantics<parallel>, #tpu.dimension_semantics<parallel>], iteration_bounds = array<i64: 2, 1>, scalar_prefetch = 0 : i64, scratch_operands = 0 : i64, tpu.core_type = #tpu.core_type<tc>, window_params = [{transform_indices = @transform_0, window_bounds = array<i64: 1, 4, 256>}, {pipeline_mode = #tpu.pipeline_mode<synchronous>, transform_indices = @transform_1, window_bounds = array<i64: 4, 32>}, {pipeline_mode = #tpu.pipeline_mode<synchronous>, transform_indices = @transform_2, window_bounds = array<i64: 1, 32>}, {transform_indices = @transform_3, window_bounds = array<i64: 1, 256, 32>}]} {
    %c0 = arith.constant 0 : index
    %c0_0 = arith.constant 0 : index
    %c0_1 = arith.constant 0 : index
    %0 = vector.load %arg2[%c0, %c0_0, %c0_1] : memref<1x4x256xf32, #tpu.memory_space<vmem>>, vector<1x4x256xf32>
    %1 = vector.shape_cast %0 : vector<1x4x256xf32> to vector<4x256xf32>
    %c0_2 = arith.constant 0 : index
    %c0_3 = arith.constant 0 : index
    %2 = vector.load %arg3[%c0_2, %c0_3] : memref<4x32xf32, #tpu.memory_space<vmem>>, vector<4x32xf32>
    %cst = arith.constant dense<0.000000e+00> : vector<256x32xf32>
    %3 = tpu.matmul %1, %2, %cst {dimension_numbers = #tpu.dot_dimension_numbers<[0], [0], [1], [1], [0, 1, 1, 1], [], []>} : vector<4x256xf32>, vector<4x32xf32>, vector<256x32xf32> -> vector<256x32xf32>
    %c0_4 = arith.constant 0 : index
    %c0_5 = arith.constant 0 : index
    %4 = vector.load %arg4[%c0_4, %c0_5] : memref<1x32xf32, #tpu.memory_space<vmem>>, vector<1x32xf32>
    %5 = vector.broadcast %4 : vector<1x32xf32> to vector<256x32xf32>
    %6 = arith.addf %3, %5 : vector<256x32xf32>
    %c0_6 = arith.constant 0 : index
    %c0_7 = arith.constant 0 : index
    %c0_8 = arith.constant 0 : index
    %7 = vector.load %arg5[%c0_6, %c0_7, %c0_8] : memref<1x256x32xf32, #tpu.memory_space<vmem>>, vector<1x256x32xf32>
    %8 = vector.shape_cast %7 : vector<1x256x32xf32> to vector<256x32xf32>
    %9 = vector.shape_cast %6 : vector<256x32xf32> to vector<1x256x32xf32>
    tpu.vector_store %arg5[%c0_6, %c0_7, %c0_8], %9 {strides = array<i32>} : memref<1x256x32xf32, #tpu.memory_space<vmem>>, vector<1x256x32xf32>,
    return
  }
  func.func @transform_0(%arg0: i32, %arg1: i32) -> (i32, i32, i32) {
    %c0_i32 = arith.constant 0 : i32
    %c0_i32_0 = arith.constant 0 : i32
    return %arg0, %c0_i32, %arg1 : i32, i32, i32
  }
  func.func @transform_1(%arg0: i32, %arg1: i32) -> (i32, i32) {
    %c0_i32 = arith.constant 0 : i32
    %c0_i32_0 = arith.constant 0 : i32
    %c0_i32_1 = arith.constant 0 : i32
    return %c0_i32, %c0_i32_0 : i32, i32
  }
  func.func @transform_2(%arg0: i32, %arg1: i32) -> (i32, i32) {
    %c0_i32 = arith.constant 0 : i32
    %c0_i32_0 = arith.constant 0 : i32
    %c0_i32_1 = arith.constant 0 : i32
    return %c0_i32, %c0_i32_0 : i32, i32
  }
  func.func @transform_3(%arg0: i32, %arg1: i32) -> (i32, i32, i32) {
    %c0_i32 = arith.constant 0 : i32
    %c0_i32_0 = arith.constant 0 : i32
    return %arg0, %arg1, %c0_i32 : i32, i32, i32
  }
}

</mosaic_0001>

<llo_original>
// kernel: patch_embedding.1
$region0: #{patch_embedding.1}
  #allocation0 [shape = 'u32[]', space=smem, size = 0x4, offset = 0x4, fixed_abs, tag = 'smem constant byte address 0x4 - core index']
  #allocation1 [shape = 'u32[72,128]{1,0:T(1,128)}', space=vmem, size = 0x9000, scoped, tag = 'internal scratch']
  %s0 = inlined_call_operand.vmem [shape: f32[2,4,256], index: 0, kind: input, shape index: {}]
  %s1 = inlined_call_operand.vmem [shape: f32[4,32], index: 1, kind: input, shape index: {}]
  %s2 = inlined_call_operand.vmem [shape: f32[1,32], index: 2, kind: input, shape index: {}]
  %s3 = inlined_call_operand.vmem [shape: f32[2,256,32], index: 3, kind: output, shape index: {}]
  %s4 = sld [smem:[#allocation0]]
  $region45: #{patch_embedding.1} parent=0
    _
  %s6 = ssub.s32 1, %s4
  %s7 = scalar_select 0, %s6, %s4
  loop: start=0, step=1, limit=4
  $region2: #{patch_embedding.1} parent=0 // loop_pre_header
    _
  $region3: #{patch_embedding.1} parent=0 // loop_header
    %s9 = sphi 0, %s13
    %p10 = scmp.ge.s32.totalorder %s9, 4
    %s16 = sphi 0, %s28
    %s17 = sphi 0, %s24
    %s18 = sphi 0, %s16
    %s19 = sphi 0, %s17
    %s20 = sphi 0, %s18
    %s21 = sphi 0, %s19
    %s33 = sphi 0, %s35
    %s36 = sphi 0, %s33
    %s37 = sphi 0, %s36
    %s53 = sphi 0, %s37
    %s57 = sphi 0, %s57
    %s59 = sphi 0, %s57
    %s60 = sphi 0, %s59
    %s74 = sphi 0, %s60
    %s78 = sphi 0, %s78
    %s80 = sphi 0, %s78
    %s81 = sphi 0, %s80
    %s95 = sphi 0, %s81
    %s103 = sphi 0, %s105
    %s106 = sphi 0, %s103
    %s107 = sphi 0, %s106
    %s123 = sphi 0, %s107
  $region4: #{patch_embedding.1} parent=0 // loop_header_branch
    %12 = sbr.rel (%p10) target = $region8
  $region5: #{patch_embedding.1} parent=0 // loop_body
    %s14 = ssub.s32 %s9, 1
    %s15 = ssub.s32 %s9, 2
    %s22 = sadd.s32 1, %s17
    %p23 = scmp.ge.s32.totalorder %s22, 1
    %s24 = scalar_select %p23, 0, %s22
    %s25 = sadd.s32 1, %s16
    %s26 = scalar_select %p23, %s25, %s16
    %p27 = scmp.ge.s32.totalorder %s26, 2
    %s28 = scalar_select %p27, 0, %s26
    %s29 = ssub.s32 %s16, %s28
    %s30 = ssub.s32 %s17, %s24
    %s31 = sor.u32 %s29, %s30
    %p32 = scmp.eq.s32.totalorder %s31, 0
    %s34 = sadd.s32 %s33, 1
    %s35 = scalar_select %p32, %s33, %s34
    %p38 = pneg %p32
    %p39 = scmp.eq.s32.totalorder %s9, 1
    %p40 = por %p38, %p39
    %p41 = scmp.ne.s32.totalorder %s33, %s36
    %p42 = scmp.eq.s32.totalorder %s9, 0
    %p43 = por %p41, %p42
    %p44 = scmp.ne.s32.totalorder %s33, %s36
    %p45 = scmp.eq.s32.totalorder %s14, 1
    %p46 = por %p44, %p45
    %p47 = scmp.ne.s32.totalorder %s36, %s37
    %p48 = scmp.eq.s32.totalorder %s14, 0
    %p49 = por %p47, %p48
    %p50 = scmp.ne.s32.totalorder %s36, %s37
    %p51 = scmp.eq.s32.totalorder %s15, 1
    %p52 = por %p50, %p51
    %p54 = scmp.ne.s32.totalorder %s37, %s53
    %p55 = scmp.eq.s32.totalorder %s15, 0
    %p56 = por %p54, %p55
    %s58 = sadd.s32 %s57, 1
    %p61 = scmp.eq.s32.totalorder %s9, 1
    %p62 = scmp.ne.s32.totalorder %s57, %s59
    %p63 = scmp.eq.s32.totalorder %s9, 0
    %p64 = por %p62, %p63
    %p65 = scmp.ne.s32.totalorder %s57, %s59
    %p66 = scmp.eq.s32.totalorder %s14, 1
    %p67 = por %p65, %p66
    %p68 = scmp.ne.s32.totalorder %s59, %s60
    %p69 = scmp.eq.s32.totalorder %s14, 0
    %p70 = por %p68, %p69
    %p71 = scmp.ne.s32.totalorder %s59, %s60
    %p72 = scmp.eq.s32.totalorder %s15, 1
    %p73 = por %p71, %p72
    %p75 = scmp.ne.s32.totalorder %s60, %s74
    %p76 = scmp.eq.s32.totalorder %s15, 0
    %p77 = por %p75, %p76
    %s79 = sadd.s32 %s78, 1
    %p82 = scmp.eq.s32.totalorder %s9, 1
    %p83 = scmp.ne.s32.totalorder %s78, %s80
    %p84 = scmp.eq.s32.totalorder %s9, 0
    %p85 = por %p83, %p84
    %p86 = scmp.ne.s32.totalorder %s78, %s80
    %p87 = scmp.eq.s32.totalorder %s14, 1
    %p88 = por %p86, %p87
    %p89 = scmp.ne.s32.totalorder %s80, %s81
    %p90 = scmp.eq.s32.totalorder %s14, 0
    %p91 = por %p89, %p90
    %p92 = scmp.ne.s32.totalorder %s80, %s81
    %p93 = scmp.eq.s32.totalorder %s15, 1
    %p94 = por %p92, %p93
    %p96 = scmp.ne.s32.totalorder %s81, %s95
    %p97 = scmp.eq.s32.totalorder %s15, 0
    %p98 = por %p96, %p97
    %s99 = ssub.s32 %s16, %s28
    %s100 = ssub.s32 %s17, %s24
    %s101 = sor.u32 %s99, %s100
    %p102 = scmp.eq.s32.totalorder %s101, 0
    %s104 = sadd.s32 %s103, 1
    %s105 = scalar_select %p102, %s103, %s104
    %p108 = pneg %p102
    %p109 = scmp.eq.s32.totalorder %s9, 1
    %p110 = por %p108, %p109
    %p111 = scmp.ne.s32.totalorder %s103, %s106
    %p112 = scmp.eq.s32.totalorder %s9, 0
    %p113 = por %p111, %p112
    %p114 = scmp.ne.s32.totalorder %s103, %s106
    %p115 = scmp.eq.s32.totalorder %s14, 1
    %p116 = por %p114, %p115
    %p117 = scmp.ne.s32.totalorder %s106, %s107
    %p118 = scmp.eq.s32.totalorder %s14, 0
    %p119 = por %p117, %p118
    %p120 = scmp.ne.s32.totalorder %s106, %s107
    %p121 = scmp.eq.s32.totalorder %s15, 1
    %p122 = por %p120, %p121
    %p124 = scmp.ne.s32.totalorder %s107, %s123
    %p125 = scmp.eq.s32.totalorder %s15, 0
    %p126 = por %p124, %p125
    %p127 = scmp.le.s32.totalorder 1, %s9
    %p128 = scmp.lt.s32.totalorder %s9, 3
    %p129 = pnand %p127, %p128
    %p130 = pneg %p129
    // Predicated region
    $region9: #{patch_embedding.1} parent=5 // pred_check
      _
    $region10: #{patch_embedding.1} parent=5 // pred_check_branch
      %132 = sbr.rel (%p129) target = $region12
    $region11: #{patch_embedding.1} parent=5 // pred_region
      %s133 = ssub.s32 %s9, 1
      // Predicated region
      $region13: #{patch_embedding.1} parent=11 // pred_check
        %p134 = pneg %p70
      $region14: #{patch_embedding.1} parent=11 // pred_check_branch
        %136 = sbr.rel (%p134) target = $region16
      $region15: #{patch_embedding.1} parent=11 // pred_region
        _
      $region16: #{patch_embedding.1} parent=11 // pred_fallthru
        _
      // Predicated region
      $region17: #{patch_embedding.1} parent=11 // pred_check
        %p137 = pneg %p91
      $region18: #{patch_embedding.1} parent=11 // pred_check_branch
        %139 = sbr.rel (%p137) target = $region20
      $region19: #{patch_embedding.1} parent=11 // pred_region
        _
      $region20: #{patch_embedding.1} parent=11 // pred_fallthru
        _
    $region12: #{patch_embedding.1} parent=5 // pred_fallthru
      _
    %p140 = scmp.lt.s32.totalorder %s9, 2
    // Predicated region
    $region21: #{patch_embedding.1} parent=5 // pred_check
      %p141 = pneg %p140
    $region22: #{patch_embedding.1} parent=5 // pred_check_branch
      %143 = sbr.rel (%p141) target = $region24
    $region23: #{patch_embedding.1} parent=5 // pred_region
      // Predicated region
      $region25: #{patch_embedding.1} parent=23 // pred_check
        %p144 = pneg %p43
      $region26: #{patch_embedding.1} parent=23 // pred_check_branch
        %146 = sbr.rel (%p144) target = $region28
      $region27: #{patch_embedding.1} parent=23 // pred_region
        %s147 = smul.u32 2, %s17
        %p148 = scmp.lt.s32.totalorder %s16, 1
        %s149 = scalar_select %p148, %s16, 1
        %p150 = scmp.lt.s32.totalorder %s147, 1
        %s151 = scalar_select %p150, %s147, 1
        %s152 = smul.addr %s149, 2
        %s153 = sadd.s32 %s151, %s152
        %s154 = smul.addr %s153, 4
        %s155 = scalar_lea.vmem %s0, %s154
        %s156 = smul.u32 2, %s17
      $region28: #{patch_embedding.1} parent=23 // pred_fallthru
        _
    $region24: #{patch_embedding.1} parent=5 // pred_fallthru
      _
    %p157 = scmp.le.s32.totalorder 1, %s9
    %p158 = scmp.lt.s32.totalorder %s9, 3
    %p159 = pnand %p157, %p158
    %p160 = pneg %p159
    // Predicated region
    $region29: #{patch_embedding.1} parent=5 // pred_check
      _
    $region30: #{patch_embedding.1} parent=5 // pred_check_branch
      %162 = sbr.rel (%p159) target = $region32
    $region31: #{patch_embedding.1} parent=5 // pred_region
      %s163 = ssub.s32 %s9, 1
      %s164 = smul.u32 2, %s19
      %p165 = scmp.lt.s32.totalorder %s18, 1
      %s166 = scalar_select %p165, %s18, 1
      %p167 = scmp.lt.s32.totalorder %s164, 1
      %s168 = scalar_select %p167, %s164, 1
      %s169 = smul.addr %s166, 2
      %s170 = sadd.s32 %s168, %s169
      %s171 = smul.addr %s170, 4
      %s172 = scalar_lea.vmem %s0, %s171
      %p173 = pneg %p49
      %p174 = pneg %p46
      %p175 = pneg %p70
      %p176 = pneg %p67
      %p177 = pneg %p91
      %p178 = pneg %p88
      %p179 = pneg %p119
      %p180 = pneg %p116
      %s181 = smul.u32 32, %s19
      %p182 = scmp.lt.s32.totalorder %s18, 1
      %s183 = scalar_select %p182, %s18, 1
      %p184 = scmp.lt.s32.totalorder %s181, 31
      %s185 = scalar_select %p184, %s181, 31
      %s186 = smul.addr %s183, 32
      %s187 = sadd.s32 %s185, %s186
      %s188 = smul.addr %s187, 8
      %s189 = scalar_lea.vmem %s3, %s188
      %s190 = smul.u32 2, %s19
      %p191 = scmp.lt.s32.totalorder %s18, 1
      %s192 = scalar_select %p191, %s18, 1
      %p193 = scmp.lt.s32.totalorder %s190, 1
      %s194 = scalar_select %p193, %s190, 1
      %s195 = smul.addr %s192, 2
      %s196 = sadd.s32 %s194, %s195
      %s197 = smul.addr %s196, 4
      %s198 = scalar_lea.vmem %s0, %s197
      %s199 = smul.u32 2, %s19
      %s200 = smul.u32 32, %s19
      %p201 = scmp.lt.s32.totalorder %s18, 1
      %s202 = scalar_select %p201, %s18, 1
      %p203 = scmp.lt.s32.totalorder %s200, 31
      %s204 = scalar_select %p203, %s200, 31
      %s205 = smul.addr %s202, 32
      %s206 = sadd.s32 %s204, %s205
      %s207 = smul.addr %s206, 8
      %s208 = scalar_lea.vmem %s3, %s207
      %s209 = smul.u32 32, %s19
      %v210 = vld [vmem:[%s198] sm:$0xff]
      %v211 = vld [vmem:[%s1] sm:$0xf]
      %v212 = vld [vmem:[%s2] sm:$0x1]
      %v214 = vperm.slane %v212, 0
      %217 = vst [vmem:[#allocation1] ss:$2 sm:$0xff] %v210
      %v218 = vld.sshfl [vmem:[#allocation1] sm:$0xff pattern:$0x75316420]
      %v219 = vld.sshfl [vmem:[#allocation1 + $0x8] sm:$0xff pattern:$0x75316420]
      %222 = vxpose.xlu0.b32.start [1/16] %v218, 128
      %223 = vxpose.xlu0.b32.cont [2/16] 0.0, 128
      %224 = vxpose.xlu0.b32.cont [3/16] 0.0, 128
      %225 = vxpose.xlu0.b32.cont [4/16] 0.0, 128
      %226 = vxpose.xlu0.b32.cont [5/16] 0.0, 128
      %227 = vxpose.xlu0.b32.cont [6/16] 0.0, 128
      %228 = vxpose.xlu0.b32.cont [7/16] 0.0, 128
      %229 = vxpose.xlu0.b32.cont [8/16] 0.0, 128
      %230 = vxpose.xlu0.b32.cont [9/16] 0.0, 128
      %231 = vxpose.xlu0.b32.cont [10/16] 0.0, 128
      %232 = vxpose.xlu0.b32.cont [11/16] 0.0, 128
      %233 = vxpose.xlu0.b32.cont [12/16] 0.0, 128
      %234 = vxpose.xlu0.b32.cont [13/16] 0.0, 128
      %235 = vxpose.xlu0.b32.cont [14/16] 0.0, 128
      %236 = vxpose.xlu0.b32.cont [15/16] 0.0, 128
      %237 = vxpose.xlu0.b32.end [16/16] 0.0, 128
      %v238 = vpop.trf.xlu0
      %v239 = vpop.trf.xlu0
      %v240 = vpop.trf.xlu0
      %v241 = vpop.trf.xlu0
      %v242 = vpop.trf.xlu0
      %v243 = vpop.trf.xlu0
      %v244 = vpop.trf.xlu0
      %v245 = vpop.trf.xlu0
      %v246 = vpop.trf.xlu0
      %v247 = vpop.trf.xlu0
      %v248 = vpop.trf.xlu0
      %v249 = vpop.trf.xlu0
      %v250 = vpop.trf.xlu0
      %v251 = vpop.trf.xlu0
      %v252 = vpop.trf.xlu0
      %v253 = vpop.trf.xlu0
      %254 = vxpose.xlu0.b32.start [1/16] %v219, 128
      %255 = vxpose.xlu0.b32.cont [2/16] 0.0, 128
      %256 = vxpose.xlu0.b32.cont [3/16] 0.0, 128
      %257 = vxpose.xlu0.b32.cont [4/16] 0.0, 128
      %258 = vxpose.xlu0.b32.cont [5/16] 0.0, 128
      %259 = vxpose.xlu0.b32.cont [6/16] 0.0, 128
      %260 = vxpose.xlu0.b32.cont [7/16] 0.0, 128
      %261 = vxpose.xlu0.b32.cont [8/16] 0.0, 128
      %262 = vxpose.xlu0.b32.cont [9/16] 0.0, 128
      %263 = vxpose.xlu0.b32.cont [10/16] 0.0, 128
      %264 = vxpose.xlu0.b32.cont [11/16] 0.0, 128
      %265 = vxpose.xlu0.b32.cont [12/16] 0.0, 128
      %266 = vxpose.xlu0.b32.cont [13/16] 0.0, 128
      %267 = vxpose.xlu0.b32.cont [14/16] 0.0, 128
      %268 = vxpose.xlu0.b32.cont [15/16] 0.0, 128
      %269 = vxpose.xlu0.b32.end [16/16] 0.0, 128
      %v270 = vpop.trf.xlu0
      %v271 = vpop.trf.xlu0
      %v272 = vpop.trf.xlu0
      %v273 = vpop.trf.xlu0
      %v274 = vpop.trf.xlu0
      %v275 = vpop.trf.xlu0
      %v276 = vpop.trf.xlu0
      %v277 = vpop.trf.xlu0
      %v278 = vpop.trf.xlu0
      %v279 = vpop.trf.xlu0
      %v280 = vpop.trf.xlu0
      %v281 = vpop.trf.xlu0
      %v282 = vpop.trf.xlu0
      %v283 = vpop.trf.xlu0
      %v284 = vpop.trf.xlu0
      %v285 = vpop.trf.xlu0
      %vm286 = vcmask 31744
      %v288 = vsel %vm286, %v238, 0
      %v291 = vsel %vm286, %v239, 0
      %v294 = vsel %vm286, %v240, 0
      %v297 = vsel %vm286, %v241, 0
      %v300 = vsel %vm286, %v242, 0
      %v303 = vsel %vm286, %v243, 0
      %v306 = vsel %vm286, %v244, 0
      %v309 = vsel %vm286, %v245, 0
      %v312 = vsel %vm286, %v246, 0
      %v315 = vsel %vm286, %v247, 0
      %v318 = vsel %vm286, %v248, 0
      %v321 = vsel %vm286, %v249, 0
      %v324 = vsel %vm286, %v250, 0
      %v327 = vsel %vm286, %v251, 0
      %v330 = vsel %vm286, %v252, 0
      %v333 = vsel %vm286, %v253, 0
      %v336 = vsel %vm286, %v270, 0
      %v339 = vsel %vm286, %v271, 0
      %v342 = vsel %vm286, %v272, 0
      %v345 = vsel %vm286, %v273, 0
      %v348 = vsel %vm286, %v274, 0
      %v351 = vsel %vm286, %v275, 0
      %v354 = vsel %vm286, %v276, 0
      %v357 = vsel %vm286, %v277, 0
      %v360 = vsel %vm286, %v278, 0
      %v363 = vsel %vm286, %v279, 0
      %v366 = vsel %vm286, %v280, 0
      %v369 = vsel %vm286, %v281, 0
      %v372 = vsel %vm286, %v282, 0
      %v375 = vsel %vm286, %v283, 0
      %v378 = vsel %vm286, %v284, 0
      %v381 = vsel %vm286, %v285, 0
      %vm383 = vcmask 1043456
      %v385 = vsel %vm383, %v211, 0
      %387 = vmatpush.msra.mxu0 0.0
      %388 = vmatpush.msra.mxu0 0.0
      %389 = vmatpush.msra.mxu0 0.0
      %390 = vmatpush.msra.mxu0 0.0
      %391 = vmatpush.msra.mxu0 0.0
      %392 = vmatpush.msra.mxu0 0.0
      %393 = vmatpush.msra.mxu0 0.0
      %394 = vmatpush.msra.mxu0 0.0
      %395 = vmatpush.msra.mxu0 0.0
      %396 = vmatpush.msra.mxu0 0.0
      %397 = vmatpush.msra.mxu0 0.0
      %398 = vmatpush.msra.mxu0 0.0
      %399 = vmatpush.msra.mxu0 0.0
      %400 = vmatpush.msra.mxu0 0.0
      %401 = vmatpush.msra.mxu0 0.0
      %402 = vmatpush.msra.mxu0 %v385
      %403 = vmatmul.f32.gmra.mxu0 %v288
      %v404 = vpop.f32.mrf.mxu0
      %v405 = vadd.f32 %v214, %v404
      %406 = vmatmul.f32.gmra.mxu0 %v291
      %v407 = vpop.f32.mrf.mxu0
      %v408 = vadd.f32 %v214, %v407
      %409 = vmatmul.f32.gmra.mxu0 %v294
      %v410 = vpop.f32.mrf.mxu0
      %v411 = vadd.f32 %v214, %v410
      %412 = vmatmul.f32.gmra.mxu0 %v297
      %v413 = vpop.f32.mrf.mxu0
      %v414 = vadd.f32 %v214, %v413
      %415 = vmatmul.f32.gmra.mxu0 %v300
      %v416 = vpop.f32.mrf.mxu0
      %v417 = vadd.f32 %v214, %v416
      %418 = vmatmul.f32.gmra.mxu0 %v303
      %v419 = vpop.f32.mrf.mxu0
      %v420 = vadd.f32 %v214, %v419
      %421 = vmatmul.f32.gmra.mxu0 %v306
      %v422 = vpop.f32.mrf.mxu0
      %v423 = vadd.f32 %v214, %v422
      %424 = vmatmul.f32.gmra.mxu0 %v309
      %v425 = vpop.f32.mrf.mxu0
      %v426 = vadd.f32 %v214, %v425
      %427 = vmatmul.f32.gmra.mxu0 %v312
      %v428 = vpop.f32.mrf.mxu0
      %v429 = vadd.f32 %v214, %v428
      %430 = vmatmul.f32.gmra.mxu0 %v315
      %v431 = vpop.f32.mrf.mxu0
      %v432 = vadd.f32 %v214, %v431
      %433 = vmatmul.f32.gmra.mxu0 %v318
      %v434 = vpop.f32.mrf.mxu0
      %v435 = vadd.f32 %v214, %v434
      %436 = vmatmul.f32.gmra.mxu0 %v321
      %v437 = vpop.f32.mrf.mxu0
      %v438 = vadd.f32 %v214, %v437
      %439 = vmatmul.f32.gmra.mxu0 %v324
      %v440 = vpop.f32.mrf.mxu0
      %v441 = vadd.f32 %v214, %v440
      %442 = vmatmul.f32.gmra.mxu0 %v327
      %v443 = vpop.f32.mrf.mxu0
      %v444 = vadd.f32 %v214, %v443
      %445 = vmatmul.f32.gmra.mxu0 %v330
      %v446 = vpop.f32.mrf.mxu0
      %v447 = vadd.f32 %v214, %v446
      %448 = vmatmul.f32.gmra.mxu0 %v333
      %v449 = vpop.f32.mrf.mxu0
      %v450 = vadd.f32 %v214, %v449
      %451 = vmatmul.f32.gmra.mxu0 %v336
      %v452 = vpop.f32.mrf.mxu0
      %v453 = vadd.f32 %v214, %v452
      %454 = vmatmul.f32.gmra.mxu0 %v339
      %v455 = vpop.f32.mrf.mxu0
      %v456 = vadd.f32 %v214, %v455
      %457 = vmatmul.f32.gmra.mxu0 %v342
      %v458 = vpop.f32.mrf.mxu0
      %v459 = vadd.f32 %v214, %v458
      %460 = vmatmul.f32.gmra.mxu0 %v345
      %v461 = vpop.f32.mrf.mxu0
      %v462 = vadd.f32 %v214, %v461
      %463 = vmatmul.f32.gmra.mxu0 %v348
      %v464 = vpop.f32.mrf.mxu0
      %v465 = vadd.f32 %v214, %v464
      %466 = vmatmul.f32.gmra.mxu0 %v351
      %v467 = vpop.f32.mrf.mxu0
      %v468 = vadd.f32 %v214, %v467
      %469 = vmatmul.f32.gmra.mxu0 %v354
      %v470 = vpop.f32.mrf.mxu0
      %v471 = vadd.f32 %v214, %v470
      %472 = vmatmul.f32.gmra.mxu0 %v357
      %v473 = vpop.f32.mrf.mxu0
      %v474 = vadd.f32 %v214, %v473
      %475 = vmatmul.f32.gmra.mxu0 %v360
      %v476 = vpop.f32.mrf.mxu0
      %v477 = vadd.f32 %v214, %v476
      %478 = vmatmul.f32.gmra.mxu0 %v363
      %v479 = vpop.f32.mrf.mxu0
      %v480 = vadd.f32 %v214, %v479
      %481 = vmatmul.f32.gmra.mxu0 %v366
      %v482 = vpop.f32.mrf.mxu0
      %v483 = vadd.f32 %v214, %v482
      %484 = vmatmul.f32.gmra.mxu0 %v369
      %v485 = vpop.f32.mrf.mxu0
      %v486 = vadd.f32 %v214, %v485
      %487 = vmatmul.f32.gmra.mxu0 %v372
      %v488 = vpop.f32.mrf.mxu0
      %v489 = vadd.f32 %v214, %v488
      %490 = vmatmul.f32.gmra.mxu0 %v375
      %v491 = vpop.f32.mrf.mxu0
      %v492 = vadd.f32 %v214, %v491
      %493 = vmatmul.f32.gmra.mxu0 %v378
      %v494 = vpop.f32.mrf.mxu0
      %v495 = vadd.f32 %v214, %v494
      %496 = vmatmul.f32.gmra.mxu0 %v381
      %v497 = vpop.f32.mrf.mxu0
      %v498 = vadd.f32 %v214, %v497
      %499 = vdwg.mxu0
      %vm500 = vcmask 261120
      %501 = vst.msk [vmem:[%s208] sm:$0xff] %vm500, %v405
      %502 = vst.msk [vmem:[%s208 + $0x8] sm:$0xff] %vm500, %v408
      %503 = vst.msk [vmem:[%s208 + $0x10] sm:$0xff] %vm500, %v411
      %504 = vst.msk [vmem:[%s208 + $0x18] sm:$0xff] %vm500, %v414
      %505 = vst.msk [vmem:[%s208 + $0x20] sm:$0xff] %vm500, %v417
      %506 = vst.msk [vmem:[%s208 + $0x28] sm:$0xff] %vm500, %v420
      %507 = vst.msk [vmem:[%s208 + $0x30] sm:$0xff] %vm500, %v423
      %508 = vst.msk [vmem:[%s208 + $0x38] sm:$0xff] %vm500, %v426
      %509 = vst.msk [vmem:[%s208 + $0x40] sm:$0xff] %vm500, %v429
      %510 = vst.msk [vmem:[%s208 + $0x48] sm:$0xff] %vm500, %v432
      %511 = vst.msk [vmem:[%s208 + $0x50] sm:$0xff] %vm500, %v435
      %512 = vst.msk [vmem:[%s208 + $0x58] sm:$0xff] %vm500, %v438
      %513 = vst.msk [vmem:[%s208 + $0x60] sm:$0xff] %vm500, %v441
      %514 = vst.msk [vmem:[%s208 + $0x68] sm:$0xff] %vm500, %v444
      %515 = vst.msk [vmem:[%s208 + $0x70] sm:$0xff] %vm500, %v447
      %516 = vst.msk [vmem:[%s208 + $0x78] sm:$0xff] %vm500, %v450
      %517 = vst.msk [vmem:[%s208 + $0x80] sm:$0xff] %vm500, %v453
      %518 = vst.msk [vmem:[%s208 + $0x88] sm:$0xff] %vm500, %v456
      %519 = vst.msk [vmem:[%s208 + $0x90] sm:$0xff] %vm500, %v459
      %520 = vst.msk [vmem:[%s208 + $0x98] sm:$0xff] %vm500, %v462
      %521 = vst.msk [vmem:[%s208 + $0xa0] sm:$0xff] %vm500, %v465
      %522 = vst.msk [vmem:[%s208 + $0xa8] sm:$0xff] %vm500, %v468
      %523 = vst.msk [vmem:[%s208 + $0xb0] sm:$0xff] %vm500, %v471
      %524 = vst.msk [vmem:[%s208 + $0xb8] sm:$0xff] %vm500, %v474
      %525 = vst.msk [vmem:[%s208 + $0xc0] sm:$0xff] %vm500, %v477
      %526 = vst.msk [vmem:[%s208 + $0xc8] sm:$0xff] %vm500, %v480
      %527 = vst.msk [vmem:[%s208 + $0xd0] sm:$0xff] %vm500, %v483
      %528 = vst.msk [vmem:[%s208 + $0xd8] sm:$0xff] %vm500, %v486
      %529 = vst.msk [vmem:[%s208 + $0xe0] sm:$0xff] %vm500, %v489
      %530 = vst.msk [vmem:[%s208 + $0xe8] sm:$0xff] %vm500, %v492
      %531 = vst.msk [vmem:[%s208 + $0xf0] sm:$0xff] %vm500, %v495
      %532 = vst.msk [vmem:[%s208 + $0xf8] sm:$0xff] %vm500, %v498
      %s533 = smul.u32 32, %s19
      %p534 = scmp.lt.s32.totalorder %s18, 1
      %s535 = scalar_select %p534, %s18, 1
      %p536 = scmp.lt.s32.totalorder %s533, 31
      %s537 = scalar_select %p536, %s533, 31
      %s538 = smul.addr %s535, 32
      %s539 = sadd.s32 %s537, %s538
      %s540 = smul.addr %s539, 8
      %s541 = scalar_lea.vmem %s3, %s540
      // Predicated region
      $region33: #{patch_embedding.1} parent=31 // pred_check
        %p542 = pneg %p116
      $region34: #{patch_embedding.1} parent=31 // pred_check_branch
        %544 = sbr.rel (%p542) target = $region36
      $region35: #{patch_embedding.1} parent=31 // pred_region
        %s545 = smul.u32 32, %s19
      $region36: #{patch_embedding.1} parent=31 // pred_fallthru
        _
    $region32: #{patch_embedding.1} parent=5 // pred_fallthru
      _
    %p546 = scmp.le.s32.totalorder 2, %s9
    // Predicated region
    $region37: #{patch_embedding.1} parent=5 // pred_check
      %p547 = pneg %p546
    $region38: #{patch_embedding.1} parent=5 // pred_check_branch
      %549 = sbr.rel (%p547) target = $region40
    $region39: #{patch_embedding.1} parent=5 // pred_region
      %s550 = ssub.s32 %s9, 2
      // Predicated region
      $region41: #{patch_embedding.1} parent=39 // pred_check
        %p551 = pneg %p122
      $region42: #{patch_embedding.1} parent=39 // pred_check_branch
        %553 = sbr.rel (%p551) target = $region44
      $region43: #{patch_embedding.1} parent=39 // pred_region
        %s554 = smul.u32 32, %s21
        %p555 = scmp.lt.s32.totalorder %s20, 1
        %s556 = scalar_select %p555, %s20, 1
        %p557 = scmp.lt.s32.totalorder %s554, 31
        %s558 = scalar_select %p557, %s554, 31
        %s559 = smul.addr %s556, 32
        %s560 = sadd.s32 %s558, %s559
        %s561 = smul.addr %s560, 8
        %s562 = scalar_lea.vmem %s3, %s561
      $region44: #{patch_embedding.1} parent=39 // pred_fallthru
        _
    $region40: #{patch_embedding.1} parent=5 // pred_fallthru
      _
  $region6: #{patch_embedding.1} parent=0 // loop_footer
    %s13 = sadd.s32 1, %s9
  $region7: #{patch_embedding.1} parent=0 // loop_footer_branch
    %8 = sbr.rel target = $region3
  $region8: #{patch_embedding.1} parent=0 // loop_exit
    _

</llo_original>
